<compile_context>
chip_gen: v6e
topology: v6e:2x2x1
jax: 0.10.0
libtpu: 0.0.40
codegen_flags: <defaults>
</compile_context>

<pallas_src>
import functools

import numpy as np
import jax
import jax.numpy as jnp
from jax.experimental import pallas as pl
from jax.experimental.pallas import tpu as pltpu

DN_FILTERS = 128
DN_INPUT_SHAPE = (8, 8, 2)   # (H, W, Cin)
DN_OUTPUT_SIZE = 64
DN_RESIDUAL_NUM = 16

H, W, CIN = DN_INPUT_SHAPE
HW = H * W                   # 64
KTAPS = 9
KPACK = KTAPS * DN_FILTERS   # 1152 : fused contraction dim (tap-major, channel-minor)
BN_EPS = 1e-5

BLOCKS_PER_STEP = 4                                  # residual blocks per grid step
NUM_STEPS = DN_RESIDUAL_NUM // BLOCKS_PER_STEP       # 4 grid steps


# --------------------------------------------------------------------------
# roll-direction probe (run once at setup): determines the static shift sign so
# that `pltpu.roll(x, shift, axis=0)[i] == x[(i + s) % HW]` for flat tap shift s.
# (Cheap one-off compile; kept instead of hard-coding to stay robust.)
# --------------------------------------------------------------------------
def _roll_probe_kernel(x_ref, o_ref):
    o_ref[...] = pltpu.roll(x_ref[...], shift=1, axis=0)


def detect_roll_sign():
    x = jnp.broadcast_to(jnp.arange(HW, dtype=jnp.float32)[:, None], (HW, DN_FILTERS))
    out = pl.pallas_call(
        _roll_probe_kernel,
        out_shape=jax.ShapeDtypeStruct((HW, DN_FILTERS), jnp.float32),
    )(x)
    # jnp.roll semantics: out[0] = x[HW-1]  ->  use shift = (-s) % HW to realize x[i+s]
    return -1 if int(out[0, 0]) == HW - 1 else +1


# --------------------------------------------------------------------------
# Pallas kernel
# --------------------------------------------------------------------------
def dual_network_kernel(x_ref, wf_ref, bf_ref, wr_ref, br_ref,
                        wp_ref, bp_ref, wv_ref, bv_ref,
                        p_ref, v_ref, x_sc, stg_sc, *, roll_sign):
    i = pl.program_id(0)

    # ---- static tap geometry: k = ky*3+kx, (dy,dx)=(ky-1,kx-1), flat shift s=dy*8+dx
    # Shared by all 2*BLOCKS_PER_STEP convs of this step; re-materialized only
    # NUM_STEPS (=4) times total thanks to the coarsened grid.
    pos = jax.lax.broadcasted_iota(jnp.int32, (HW, 1), 0)
    hh = pos // W
    ww = pos % W
    masks = []      # (64,1) bool validity mask per tap (zero wrapped rows/columns)
    shifts = []     # static roll amount per tap
    for ky in range(3):
        for kx in range(3):
            dy, dx = ky - 1, kx - 1
            ok = ((hh + dy >= 0) & (hh + dy < H) &
                  (ww + dx >= 0) & (ww + dx < W))
            masks.append(ok)
            shifts.append((roll_sign * (dy * W + dx)) % HW)

    def conv3x3(x, w, b):
        # x: (64,128) f32 ; w: (1152,128) bf16 ; b: (1,128) f32
        # Stage the 9 shifted taps into VMEM as bf16 (mask AFTER the cast: 4 bf16
        # vregs instead of 8 f32 vregs per select), then one fused K=1152 MXU
        # matmul with f32 accumulation.
        for k in range(KTAPS):
            sh = shifts[k]
            shifted = x if sh == 0 else pltpu.roll(x, shift=sh, axis=0)
            tap = shifted.astype(jnp.bfloat16)
            stg_sc[:, k * DN_FILTERS:(k + 1) * DN_FILTERS] = jnp.where(
                masks[k], tap, jnp.zeros_like(tap))
        acc = jnp.dot(stg_sc[...], w, preferred_element_type=jnp.float32)
        return acc + b

    # ---- prologue (step 0): cheap first conv on the wrapper-side im2col input ----
    @pl.when(i == 0)
    def _():
        y = jnp.dot(x_ref[...].astype(jnp.bfloat16), wf_ref[...],
                    preferred_element_type=jnp.float32) + bf_ref[...]
        x_sc[...] = jnp.maximum(y, 0.0)

    # ---- BLOCKS_PER_STEP residual blocks (this step's weights streamed by grid) ----
    br = br_ref[...]                                       # (1, G, 2, 128) f32
    for g in range(BLOCKS_PER_STEP):
        x = x_sc[...]
        h = conv3x3(x, wr_ref[0, g, 0], br[0, g, 0][None, :])
        h = jnp.maximum(h, 0.0)
        h = conv3x3(h, wr_ref[0, g, 1], br[0, g, 1][None, :])
        x_sc[...] = jnp.maximum(h + x, 0.0)

    # ---- epilogue: avg-pool + policy softmax + value tanh (last step) ----
    @pl.when(i == pl.num_programs(0) - 1)
    def _():
        xf = x_sc[...]
        pooled = jnp.mean(xf, axis=0, keepdims=True)                 # (1, 128)
        logits = jnp.dot(pooled, wp_ref[...],
                         preferred_element_type=jnp.float32) + bp_ref[...]
        m = jnp.max(logits, axis=1, keepdims=True)
        e = jnp.exp(logits - m)
        denom = jnp.sum(e, axis=1, keepdims=True)
        p_ref[...] = e * pl.reciprocal(denom, approx=True)           # (1, 64)
        val = jnp.sum(pooled * wv_ref[...], axis=1, keepdims=True) + bv_ref[...]
        v_ref[...] = jnp.tanh(val)                                   # (1, 1)


# --------------------------------------------------------------------------
# Wrapper-side first-conv im2col (layout plumbing on a tiny 64x2 array)
# --------------------------------------------------------------------------
def _im2col_first(x_hwc):
    """(8,8,2) f32 -> (64,128) f32; lane 2k+ci holds tap k (ky*3+kx) channel ci."""
    xp = jnp.pad(x_hwc, ((1, 1), (1, 1), (0, 0)))            # (10,10,2), zero pad
    taps = []
    for ky in range(3):
        for kx in range(3):
            taps.append(xp[ky:ky + H, kx:kx + W, :].reshape(HW, CIN))
    x18 = jnp.concatenate(taps, axis=1)                      # (64, 18)
    return jnp.pad(x18, ((0, 0), (0, DN_FILTERS - KTAPS * CIN)))


@functools.partial(jax.jit, static_argnames=("roll_sign",))
def _call_kernel(x_hwc, w_first, b_first, w_res, b_res,
                 w_pol, b_pol, w_val, b_val, *, roll_sign):
    x_first = _im2col_first(x_hwc)                           # (64, 128) f32
    kernel = functools.partial(dual_network_kernel, roll_sign=roll_sign)
    return pl.pallas_call(
        kernel,
        out_shape=(jax.ShapeDtypeStruct((1, DN_OUTPUT_SIZE), jnp.float32),
                   jax.ShapeDtypeStruct((1, 1), jnp.float32)),
        grid_spec=pltpu.PrefetchScalarGridSpec(
            num_scalar_prefetch=0,
            grid=(NUM_STEPS,),
            in_specs=[
                pl.BlockSpec((HW, DN_FILTERS), lambda i: (0, 0)),          # im2col input
                pl.BlockSpec((DN_FILTERS, DN_FILTERS), lambda i: (0, 0)),  # first conv w (128,128) bf16
                pl.BlockSpec((1, DN_FILTERS), lambda i: (0, 0)),           # first conv bias
                # 4 residual blocks of weights streamed per step (default
                # double-buffering; deeper Buffered() not needed per review):
                pl.BlockSpec((1, BLOCKS_PER_STEP, 2, KPACK, DN_FILTERS),
                             lambda i: (i, 0, 0, 0, 0)),                   # res weights bf16
                pl.BlockSpec((1, BLOCKS_PER_STEP, 2, DN_FILTERS),
                             lambda i: (i, 0, 0, 0)),                      # res biases f32
                pl.BlockSpec((DN_FILTERS, DN_OUTPUT_SIZE), lambda i: (0, 0)),
                pl.BlockSpec((1, DN_OUTPUT_SIZE), lambda i: (0, 0)),
                pl.BlockSpec((1, DN_FILTERS), lambda i: (0, 0)),
                pl.BlockSpec((1, 1), lambda i: (0, 0)),
            ],
            out_specs=[
                pl.BlockSpec((1, DN_OUTPUT_SIZE), lambda i: (0, 0)),
                pl.BlockSpec((1, 1), lambda i: (0, 0)),
            ],
            scratch_shapes=[
                pltpu.VMEM((HW, DN_FILTERS), jnp.float32),    # carried feature map
                pltpu.VMEM((HW, KPACK), jnp.bfloat16),        # im2col staging (64,1152)
            ],
        ),
        compiler_params=pltpu.CompilerParams(
            dimension_semantics=("arbitrary",),
            vmem_limit_bytes=32 * 1024 * 1024,
        ),
    )(x_first, w_first, b_first, w_res, b_res, w_pol, b_pol, w_val, b_val)


# --------------------------------------------------------------------------
# Glue: parameter init, BN fusion, bf16 packing, wrapper
# --------------------------------------------------------------------------
def init_params(key):
    ks = jax.random.split(key, 10)
    # raw conv weights (HWIO) + biases
    w1 = jax.random.normal(ks[0], (3, 3, CIN, DN_FILTERS), jnp.float32) * 0.10
    b1 = jax.random.normal(ks[1], (DN_FILTERS,), jnp.float32) * 0.05
    wr = jax.random.normal(
        ks[2], (DN_RESIDUAL_NUM, 2, 3, 3, DN_FILTERS, DN_FILTERS), jnp.float32) * 0.02
    br = jax.random.normal(ks[3], (DN_RESIDUAL_NUM, 2, DN_FILTERS), jnp.float32) * 0.02

    # BatchNorm params / running stats (eval-mode)
    def bn(shape, kk):
        k1, k2, k3, k4 = jax.random.split(kk, 4)
        gamma = 1.0 + 0.1 * jax.random.normal(k1, shape, jnp.float32)
        beta = 0.1 * jax.random.normal(k2, shape, jnp.float32)
        mean = 0.1 * jax.random.normal(k3, shape, jnp.float32)
        var = 1.0 + 0.1 * jnp.abs(jax.random.normal(k4, shape, jnp.float32))
        return gamma, beta, mean, var

    g1, be1, m1, v1 = bn((DN_FILTERS,), ks[4])
    gr, ber, mr, vr = bn((DN_RESIDUAL_NUM, 2, DN_FILTERS), ks[5])

    # heads (Linear stored as (in, out) == PyTorch weight.T), kept f32 (tiny)
    w_pol = jax.random.normal(ks[6], (DN_FILTERS, DN_OUTPUT_SIZE), jnp.float32) * 0.05
    b_pol = jax.random.normal(ks[7], (1, DN_OUTPUT_SIZE), jnp.float32) * 0.05
    w_val = jax.random.normal(ks[8], (1, DN_FILTERS), jnp.float32) * 0.05
    b_val = jax.random.normal(ks[9], (1, 1), jnp.float32) * 0.05

    # ---- fuse BN into convs (eval mode) ----
    scale1 = g1 / jnp.sqrt(v1 + BN_EPS)                         # (128,)
    wf_hwio = w1 * scale1                                       # (3,3,2,128)
    bf = (b1 - m1) * scale1 + be1                               # (128,)

    scaler = gr / jnp.sqrt(vr + BN_EPS)                         # (16,2,128)
    wres_hwio = wr * scaler[:, :, None, None, None, :]          # (16,2,3,3,128,128)
    bres = (br - mr) * scaler + ber                             # (16,2,128)

    # ---- bf16 weight quantization (halves streamed HBM bytes) ----
    wf_bf16 = wf_hwio.astype(jnp.bfloat16)
    wres_bf16 = wres_hwio.astype(jnp.bfloat16)

    # ---- kernel-format packing ----
    # First conv: rows 2k+ci (k = ky*3+kx) of a (128,128) bf16 matrix; rest zero.
    w_first = jnp.zeros((DN_FILTERS, DN_FILTERS), jnp.bfloat16)
    w_first = w_first.at[:KTAPS * CIN, :].set(
        wf_bf16.reshape(KTAPS * CIN, DN_FILTERS))               # (128,128) bf16
    b_first = bf[None, :]                                       # (1,128) f32
    # Residual convs: tap-major / channel-minor rows, grouped BLOCKS_PER_STEP per step.
    w_res = wres_bf16.reshape(NUM_STEPS, BLOCKS_PER_STEP, 2, KPACK, DN_FILTERS)
    b_res = bres.reshape(NUM_STEPS, BLOCKS_PER_STEP, 2, DN_FILTERS)

    return dict(
        # kernel-format
        w_first=w_first, b_first=b_first, w_res=w_res, b_res=b_res,
        w_pol=w_pol, b_pol=b_pol, w_val=w_val, b_val=b_val,
        # reference-format (fused; bf16-roundtripped so the reference uses the
        # same effective weights as the kernel)
        wf_hwio=wf_bf16.astype(jnp.float32), bf=bf,
        wres_hwio=wres_bf16.astype(jnp.float32), bres=bres,
    )


def dual_network_forward(x_nchw, params, roll_sign):
    """x_nchw: (1, 2, 8, 8) float32 (PyTorch layout). Returns (p (1,64), v (1,))."""
    N, C, _, _ = x_nchw.shape
    assert N == 1 and C == CIN
    x_hwc = jnp.transpose(x_nchw[0], (1, 2, 0))                 # (8,8,2)
    p, v = _call_kernel(x_hwc, params["w_first"], params["b_first"],
                        params["w_res"], params["b_res"], params["w_pol"],
                        params["b_pol"], params["w_val"], params["b_val"],
                        roll_sign=roll_sign)
    return p, v[:, 0]


# --------------------------------------------------------------------------
# Pure-JAX reference (same fused/quantized params, real convs) for a check
# --------------------------------------------------------------------------
def ref_forward(x_nhwc, params):
    hp = jax.lax.Precision.HIGHEST

    def conv(x, w, b):
        y = jax.lax.conv_general_dilated(
            x, w, (1, 1), "SAME",
            dimension_numbers=("NHWC", "HWIO", "NHWC"), precision=hp)
        return y + b

    x = jax.nn.relu(conv(x_nhwc, params["wf_hwio"], params["bf"]))
    for b in range(DN_RESIDUAL_NUM):
        h = jax.nn.relu(conv(x, params["wres_hwio"][b, 0], params["bres"][b, 0]))
        h = conv(h, params["wres_hwio"][b, 1], params["bres"][b, 1])
        x = jax.nn.relu(h + x)
    pooled = jnp.mean(x, axis=(1, 2))                           # (1,128)
    logits = jnp.dot(pooled, params["w_pol"], precision=hp) + params["b_pol"]
    p = jax.nn.softmax(logits, axis=1)
    v = jnp.tanh(jnp.dot(pooled, params["w_val"].T, precision=hp)
                 + params["b_val"])[:, 0]
    return p, v


# --------------------------------------------------------------------------
if __name__ == "__main__":
    key = jax.random.PRNGKey(0)
    k_in, k_par = jax.random.split(key)

    # PyTorch-style input: NCHW = (1, 2, 8, 8)
    x_nchw = jax.random.normal(k_in, (1, CIN, H, W), jnp.float32)
    params = init_params(k_par)

    roll_sign = detect_roll_sign()

    p, v = dual_network_forward(x_nchw, params, roll_sign)
    p, v = jax.block_until_ready((p, v))

    assert p.shape == (1, DN_OUTPUT_SIZE) and v.shape == (1,)
    assert abs(float(jnp.sum(p)) - 1.0) < 5e-3        # approx-reciprocal softmax
    assert bool(jnp.all(jnp.isfinite(p))) and bool(jnp.all(jnp.isfinite(v)))

    # numerical check against a plain-JAX reference (bf16 weights, f32 accumulate)
    x_nhwc = jnp.transpose(x_nchw, (0, 2, 3, 1))
    p_ref, v_ref = ref_forward(x_nhwc, params)
    np.testing.assert_allclose(np.asarray(p), np.asarray(p_ref), atol=1e-2)
    np.testing.assert_allclose(np.asarray(v), np.asarray(v_ref), atol=5e-2)

    print("KERNEL_OK")
</pallas_src>

<mosaic_0001>
module attributes {stable_mosaic.version = 11 : i64} {
  func.func @_roll_probe_kernel(%arg0: memref<64x128xf32, #tpu.memory_space<vmem>>, %arg1: memref<64x128xf32, #tpu.memory_space<vmem>>) attributes {dimension_semantics = [], scalar_prefetch = 0 : i64, scratch_operands = 0 : i64, tpu.core_type = #tpu.core_type<tc>} {
    %c0 = arith.constant 0 : index
    %c0_0 = arith.constant 0 : index
    %0 = vector.load %arg0[%c0, %c0_0] : memref<64x128xf32, #tpu.memory_space<vmem>>, vector<64x128xf32>
    %c1_i32 = arith.constant 1 : i32
    %1 = tpu.dynamic_rotate %0 by %c1_i32 dim 0 : vector<64x128xf32>, i32 -> vector<64x128xf32>
    %c0_1 = arith.constant 0 : index
    %c0_2 = arith.constant 0 : index
    %2 = vector.load %arg1[%c0_1, %c0_2] : memref<64x128xf32, #tpu.memory_space<vmem>>, vector<64x128xf32>
    tpu.vector_store %arg1[%c0_1, %c0_2], %1 {strides = array<i32>} : memref<64x128xf32, #tpu.memory_space<vmem>>, vector<64x128xf32>,
    return
  }
}

</mosaic_0001>

<llo_original>
// kernel: tpu_custom_call.1
$region0: #{tpu_custom_call.1}
  #allocation0 [shape = 'u32[]', space=smem, size = 0x4, offset = 0x4, fixed_abs, tag = 'smem constant byte address 0x4 - core index']
  #allocation1 [shape = 'u32[144,128]{1,0:T(1,128)}', space=vmem, size = 0x12000, scoped, tag = 'internal scratch']
  %s0 = inlined_call_operand.hbm [shape: f32[64,128], index: 0, kind: input, shape index: {}]
  %s1 = inlined_call_operand.hbm [shape: f32[64,128], index: 1, kind: output, shape index: {}]
  %s2 = sld [smem:[#allocation0]]
  $region18: #{tpu_custom_call.1} parent=0
    _
  %s4 = ssub.s32 1, %s2
  %s5 = scalar_select 0, %s4, %s2
  $region1: #{tpu_custom_call.1} parent=0
    #allocation2 [shape = 'u8[32768]{0}', space=vmem, size = 0x8000, scoped, tag = 'input window, operand 0, single buffered']
    #allocation3 [shape = 's32[1]{0}', space=sflag, size = 0x4, scoped, tag = 'scoped memory for tpu_custom_call.1']
    #allocation4 [shape = 's32[1]{0}', space=sflag, size = 0x4, scoped, tag = 'scoped memory for tpu_custom_call.1']
    #allocation5 [shape = 'u8[32768]{0}', space=vmem, size = 0x8000, scoped, tag = 'output window, operand 0, single buffered']
    %6 = vsyncpa [#allocation3], 0
    %7 = vsyncpa [#allocation4], 0
    // Predicated region
    $region2: #{tpu_custom_call.1} parent=1 // pred_check
      _
    $region3: #{tpu_custom_call.1} parent=1 // pred_check_branch
      %9 = sbr.rel (0) target = $region5
    $region4: #{tpu_custom_call.1} parent=1 // pred_region
      %s11 = ssub.s32 1024, 1024
      %12 = vsyncadd [#allocation3], %s11
      %s13 = sshll.u32 [#allocation2], 4
      %s14 = int_to_ptr.vmem [resolvable:$true] %s13
      %19 = dma.hbm_to_vmem [thread:$0]  %s0, 1024, %s14, [#allocation3], 128, 128, 8
    $region5: #{tpu_custom_call.1} parent=1 // pred_fallthru
      _
    // Predicated region
    $region6: #{tpu_custom_call.1} parent=1 // pred_check
      _
    $region7: #{tpu_custom_call.1} parent=1 // pred_check_branch
      %21 = sbr.rel (0) target = $region9
    $region8: #{tpu_custom_call.1} parent=1 // pred_region
      %22 = dma.done [#allocation3], 1024
    $region9: #{tpu_custom_call.1} parent=1 // pred_fallthru
      _
    %v23 = vld [vmem:[#allocation2] sm:$0xff]
    %v24 = vld [vmem:[#allocation2 + $0x8] sm:$0xff]
    %v25 = vld [vmem:[#allocation2 + $0x10] sm:$0xff]
    %v26 = vld [vmem:[#allocation2 + $0x18] sm:$0xff]
    %v27 = vld [vmem:[#allocation2 + $0x20] sm:$0xff]
    %v28 = vld [vmem:[#allocation2 + $0x28] sm:$0xff]
    %v29 = vld [vmem:[#allocation2 + $0x30] sm:$0xff]
    %v30 = vld [vmem:[#allocation2 + $0x38] sm:$0xff]
    %v31 = vrot.slane %v23, 7
    %v32 = vrot.slane %v24, 7
    %v33 = vrot.slane %v25, 7
    %v34 = vrot.slane %v26, 7
    %v35 = vrot.slane %v27, 7
    %v36 = vrot.slane %v28, 7
    %v37 = vrot.slane %v29, 7
    %v38 = vrot.slane %v30, 7
    %v39 = vlaneseq
    %v40 = vshrl.u32 %v39, 7
    %vm41 = vcmp.lt.s32.totalorder %v40, 1
    %v42 = vsel %vm41, %v37, %v38
    %v43 = vsel %vm41, %v36, %v37
    %v44 = vsel %vm41, %v35, %v36
    %v45 = vsel %vm41, %v34, %v35
    %v46 = vsel %vm41, %v33, %v34
    %v47 = vsel %vm41, %v32, %v33
    %v48 = vsel %vm41, %v31, %v32
    %v49 = vsel %vm41, %v38, %v31
    %50 = vst [vmem:[#allocation5] sm:$0xff] %v49
    %51 = vst [vmem:[#allocation5 + $0x8] sm:$0xff] %v48
    %52 = vst [vmem:[#allocation5 + $0x10] sm:$0xff] %v47
    %53 = vst [vmem:[#allocation5 + $0x18] sm:$0xff] %v46
    %54 = vst [vmem:[#allocation5 + $0x20] sm:$0xff] %v45
    %55 = vst [vmem:[#allocation5 + $0x28] sm:$0xff] %v44
    %56 = vst [vmem:[#allocation5 + $0x30] sm:$0xff] %v43
    %57 = vst [vmem:[#allocation5 + $0x38] sm:$0xff] %v42
    // Predicated region
    $region10: #{tpu_custom_call.1} parent=1 // pred_check
      _
    $region11: #{tpu_custom_call.1} parent=1 // pred_check_branch
      %59 = sbr.rel (0) target = $region13
    $region12: #{tpu_custom_call.1} parent=1 // pred_region
      %s61 = ssub.s32 1024, 1024
      %62 = vsyncadd [#allocation4], %s61
      %s63 = sshll.u32 [#allocation5], 4
      %s64 = int_to_ptr.vmem [resolvable:$true] %s63
      %69 = dma.vmem_to_hbm [thread:$0]  %s64, 1024, %s1, [#allocation4], 128, 128, 8
    $region13: #{tpu_custom_call.1} parent=1 // pred_fallthru
      _
    // Predicated region
    $region14: #{tpu_custom_call.1} parent=1 // pred_check
      _
    $region15: #{tpu_custom_call.1} parent=1 // pred_check_branch
      %71 = sbr.rel (0) target = $region17
    $region16: #{tpu_custom_call.1} parent=1 // pred_region
      %72 = dma.done [#allocation4], 1024
    $region17: #{tpu_custom_call.1} parent=1 // pred_fallthru
      _
    %73 = vsyncpa [#allocation3], 1
    %74 = vsyncpa [#allocation4], 1

</llo_original>
